<compile_context>
chip_gen: v6e
topology: v6e:2x2x1
jax: 0.10.0
libtpu: 0.0.40
codegen_flags: <defaults>
</compile_context>

<pallas_src>
import jax
import jax.numpy as jnp
from jax.experimental import pallas as pl
from jax.experimental.pallas import tpu as pltpu


def _identity_kernel(x_ref, o_ref):
    # Hot path: elementwise pass-through of the current lane-dense VMEM tile.
    # TODO(synk): fuse real augmentation (gamma / bias-field / additive noise)
    # here once it exists upstream; EUP transcendentals and
    # pltpu.prng_random_bits ride for free in this HBM-bandwidth-bound stream.
    o_ref[...] = x_ref[...]


_LANE_CANDIDATES = (4096, 2048, 1024, 512, 256, 128)
_FALLBACK_LANE = 1024
# Per-block budget: double-buffered (in + out) => 2 x 2 x 6 MiB = 24 MiB, well
# under the explicit 48 MiB scoped-VMEM limit below on every generation
# (v5e/v6e: 128 MiB physical; v7x: 64 MiB physical per TC).
_MAX_BLOCK_BYTES = 6 * 1024 * 1024
_VMEM_LIMIT_BYTES = 48 * 1024 * 1024


def _pick_layout(total_elems, itemsize):
    """Pick a lane-dense (rows, lane) view and a capped row-tile size.

    Returns (lane, rows, block_rows, padded_total).  padded_total may exceed
    total_elems when no lane candidate divides it exactly (wrapper pads).
    """
    # Dtype-aware sublane alignment: 8 rows for f32, 16 for bf16/f16, 32 for
    # int8/uint8/fp8 — keeps packed vregs full and stores unmasked.
    sublane = max(8, 32 // itemsize)

    lane = None
    padded_total = total_elems
    for cand in _LANE_CANDIDATES:
        if total_elems % cand == 0:
            lane = cand
            break
    if lane is None:
        lane = _FALLBACK_LANE
        padded_total = pl.cdiv(total_elems, lane) * lane

    rows = padded_total // lane
    max_rows = max(sublane, _MAX_BLOCK_BYTES // (lane * itemsize))
    if rows <= max_rows:
        # Full-extent leading dim: always a legal block dim, single/few steps.
        block_rows = rows
    else:
        # Largest sublane-aligned tile within budget; grid uses cdiv so rows
        # need not divide evenly (ragged last block is masked by Pallas).
        block_rows = (max_rows // sublane) * sublane
    return lane, rows, block_rows, padded_total


def intensity_augmentation(x, *, use_pallas=False):
    """SynthSeg IntensityAugmentation.forward (identity pass-through).

    The reference forward() applies no transform, so the default path returns
    x directly (no kernel launch, no HBM traffic).  Set use_pallas=True to
    route through the Pallas streaming kernel, kept purely as the fusion point
    for future augmentation math.
    """
    if not use_pallas:
        return x

    orig_shape = x.shape
    total = int(x.size)
    if total == 0:
        return x
    itemsize = jnp.dtype(x.dtype).itemsize

    lane, rows, block_rows, padded_total = _pick_layout(total, itemsize)

    flat = x.reshape(total)
    if padded_total != total:
        flat = jnp.pad(flat, (0, padded_total - total))
    x2 = flat.reshape(rows, lane)

    grid = pl.cdiv(rows, block_rows)
    spec = pl.BlockSpec((block_rows, lane), lambda i: (i, 0))
    cost = pl.CostEstimate(
        flops=0, transcendentals=0, bytes_accessed=2 * padded_total * itemsize
    )

    out = pl.pallas_call(
        _identity_kernel,
        out_shape=jax.ShapeDtypeStruct((rows, lane), x.dtype),
        grid_spec=pl.GridSpec(grid=(grid,), in_specs=[spec], out_specs=spec),
        # NOTE: no input_output_aliases — without caller-side donation the alias
        # triggers an XLA defensive copy and doubles HBM traffic.
        compiler_params=pltpu.CompilerParams(
            # "parallel" lets v7x shard the row-tile stream across its 2 TCs;
            # near-neutral on single-TC v5e/v6e.
            dimension_semantics=("parallel",),
            vmem_limit_bytes=_VMEM_LIMIT_BYTES,
        ),
        cost_estimate=cost,
    )(x2)

    out_flat = out.reshape(padded_total)
    if padded_total != total:
        out_flat = out_flat[:total]
    return out_flat.reshape(orig_shape)


if __name__ == "__main__":
    key = jax.random.PRNGKey(0)
    # [batch, H, W, channels] per the module's channels-last convention.
    x = jax.random.normal(key, (2, 16, 16, 4), dtype=jnp.float32)

    # Fast path: exact module semantics (identity, no kernel launch).
    y_fast = intensity_augmentation(x)

    # Pallas path (fusion scaffold) — exercised once to validate the kernel.
    y_kernel = intensity_augmentation(x, use_pallas=True)
    y_kernel = jax.block_until_ready(y_kernel)

    assert y_kernel.shape == x.shape
    assert y_kernel.dtype == x.dtype
    assert bool(jnp.all(y_kernel == x))
    assert bool(jnp.all(y_fast == x))
    print("KERNEL_OK")
</pallas_src>

<mosaic_0001>
module attributes {stable_mosaic.version = 11 : i64} {
  func.func @_identity_kernel(%arg0: i32, %arg1: memref<1x2048xf32, #tpu.memory_space<vmem>>, %arg2: memref<1x2048xf32, #tpu.memory_space<vmem>>) attributes {dimension_semantics = [#tpu.dimension_semantics<parallel>], iteration_bounds = array<i64: 1>, scalar_prefetch = 0 : i64, scratch_operands = 0 : i64, tpu.core_type = #tpu.core_type<tc>, window_params = [{transform_indices = @transform_0, window_bounds = array<i64: 1, 2048>}, {transform_indices = @transform_1, window_bounds = array<i64: 1, 2048>}]} {
    %c0 = arith.constant 0 : index
    %c0_0 = arith.constant 0 : index
    %0 = vector.load %arg1[%c0, %c0_0] : memref<1x2048xf32, #tpu.memory_space<vmem>>, vector<1x2048xf32>
    %c0_1 = arith.constant 0 : index
    %c0_2 = arith.constant 0 : index
    %1 = vector.load %arg2[%c0_1, %c0_2] : memref<1x2048xf32, #tpu.memory_space<vmem>>, vector<1x2048xf32>
    tpu.vector_store %arg2[%c0_1, %c0_2], %0 {strides = array<i32>} : memref<1x2048xf32, #tpu.memory_space<vmem>>, vector<1x2048xf32>,
    return
  }
  func.func @transform_0(%arg0: i32) -> (i32, i32) {
    %c0_i32 = arith.constant 0 : i32
    %c0_i32_0 = arith.constant 0 : i32
    return %arg0, %c0_i32 : i32, i32
  }
  func.func @transform_1(%arg0: i32) -> (i32, i32) {
    %c0_i32 = arith.constant 0 : i32
    %c0_i32_0 = arith.constant 0 : i32
    return %arg0, %c0_i32 : i32, i32
  }
}

</mosaic_0001>

<llo_original>
// kernel: tpu_custom_call.1
$region0: #{tpu_custom_call.1}
  #allocation0 [shape = 'u32[]', space=smem, size = 0x4, offset = 0x4, fixed_abs, tag = 'smem constant byte address 0x4 - core index']
  #allocation1 [shape = 'u32[144,128]{1,0:T(1,128)}', space=vmem, size = 0x12000, scoped, tag = 'internal scratch']
  %s0 = inlined_call_operand.hbm [shape: f32[1,2048], index: 0, kind: input, shape index: {}]
  %s1 = inlined_call_operand.hbm [shape: f32[1,2048], index: 1, kind: output, shape index: {}]
  %s2 = sld [smem:[#allocation0]]
  $region18: #{tpu_custom_call.1} parent=0
    _
  %s4 = ssub.s32 1, %s2
  %s5 = scalar_select 0, %s4, %s2
  $region1: #{tpu_custom_call.1} parent=0
    #allocation2 [shape = 'u8[8192]{0}', space=vmem, size = 0x2000, scoped, tag = 'input window, operand 0, single buffered']
    #allocation3 [shape = 's32[1]{0}', space=sflag, size = 0x4, scoped, tag = 'scoped memory for tpu_custom_call.1']
    #allocation4 [shape = 's32[1]{0}', space=sflag, size = 0x4, scoped, tag = 'scoped memory for tpu_custom_call.1']
    #allocation5 [shape = 'u8[8192]{0}', space=vmem, size = 0x2000, scoped, tag = 'output window, operand 0, single buffered']
    %6 = vsyncpa [#allocation3], 0
    %7 = vsyncpa [#allocation4], 0
    // Predicated region
    $region2: #{tpu_custom_call.1} parent=1 // pred_check
      _
    $region3: #{tpu_custom_call.1} parent=1 // pred_check_branch
      %9 = sbr.rel (0) target = $region5
    $region4: #{tpu_custom_call.1} parent=1 // pred_region
      %s11 = ssub.s32 256, 256
      %12 = vsyncadd [#allocation3], %s11
      %s14 = sshll.u32 [#allocation2], 4
      %s15 = int_to_ptr.vmem [resolvable:$true] %s14
      %17 = dma.hbm_to_vmem [thread:$0]  %s0, 256, %s15, [#allocation3]
    $region5: #{tpu_custom_call.1} parent=1 // pred_fallthru
      _
    // Predicated region
    $region6: #{tpu_custom_call.1} parent=1 // pred_check
      _
    $region7: #{tpu_custom_call.1} parent=1 // pred_check_branch
      %19 = sbr.rel (0) target = $region9
    $region8: #{tpu_custom_call.1} parent=1 // pred_region
      %20 = dma.done [#allocation3], 256
    $region9: #{tpu_custom_call.1} parent=1 // pred_fallthru
      _
    %v21 = vld [vmem:[#allocation2] sm:$0xff]
    %v22 = vld [vmem:[#allocation2 + $0x8] sm:$0xff]
    %23 = vst [vmem:[#allocation5] sm:$0xff] %v21
    %24 = vst [vmem:[#allocation5 + $0x8] sm:$0xff] %v22
    // Predicated region
    $region10: #{tpu_custom_call.1} parent=1 // pred_check
      _
    $region11: #{tpu_custom_call.1} parent=1 // pred_check_branch
      %26 = sbr.rel (0) target = $region13
    $region12: #{tpu_custom_call.1} parent=1 // pred_region
      %s28 = ssub.s32 256, 256
      %29 = vsyncadd [#allocation4], %s28
      %s31 = sshll.u32 [#allocation5], 4
      %s32 = int_to_ptr.vmem [resolvable:$true] %s31
      %34 = dma.vmem_to_hbm [thread:$0]  %s32, 256, %s1, [#allocation4]
    $region13: #{tpu_custom_call.1} parent=1 // pred_fallthru
      _
    // Predicated region
    $region14: #{tpu_custom_call.1} parent=1 // pred_check
      _
    $region15: #{tpu_custom_call.1} parent=1 // pred_check_branch
      %36 = sbr.rel (0) target = $region17
    $region16: #{tpu_custom_call.1} parent=1 // pred_region
      %37 = dma.done [#allocation4], 256
    $region17: #{tpu_custom_call.1} parent=1 // pred_fallthru
      _
    %38 = vsyncpa [#allocation3], 1
    %39 = vsyncpa [#allocation4], 1

</llo_original>
